<compile_context>
chip_gen: v7x
topology: tpu7x:2x2x1
jax: 0.10.0
libtpu: 0.0.40
codegen_flags: <defaults>
</compile_context>

<pallas_src>
import functools

import jax
import jax.numpy as jnp
from jax import lax
from jax.experimental import pallas as pl
from jax.experimental.pallas import tpu as pltpu


def _round_up(n, m):
    return ((n + m - 1) // m) * m


def _vmem_budget_bytes():
    """~80% of this generation's physical VMEM (min 32 MiB), conservative fallback."""
    cap = None
    try:
        cap = getattr(pltpu.get_tpu_info(), "vmem_capacity_bytes", None)
    except Exception:
        cap = None
    if not cap:
        cap = 64 << 20  # conservative: v7x has the smallest per-core VMEM
    return max(int(cap * 0.8), 32 << 20)


def _pick_tb(B, d_in, d_out, elt, weight_bytes, vmem_budget):
    """Batch tile: multiple of 8, VMEM-bounded, <=1024, >=2 grid steps if possible."""
    if B <= 8:
        return B  # full extent; cannot split into two multiple-of-8 tiles anyway
    # Live VMEM bytes per batch row: double-buffered x / out tiles plus the
    # single-copy f32 y intermediate and an x dtype-cast copy.
    per_row = 2 * d_in * elt + 2 * d_out * elt + d_out * 4 + d_in * 4
    leftover = vmem_budget - 2 * weight_bytes - (2 << 20)
    tb_vmem = max((leftover // per_row) // 8 * 8, 8) if leftover > 0 else 8
    # Largest tile that still gives >= 2 (balanced) grid steps: feeds both
    # TensorCores on v7x via the "parallel" batch axis; harmless on v5e/v6e.
    tb_split = _round_up(pl.cdiv(B, 2), 8)
    return int(max(8, min(tb_vmem, 1024, tb_split)))


def _fused_linear_normalize_kernel(x_ref, w_ref, b_ref, o_ref, *, precision):
    """out = l2_normalize(x @ W + b, axis=-1)  (F.normalize, p=2, dim=1, eps=1e-12)."""
    x = x_ref[...]
    # Single MXU matmul, f32 accumulation.  Weights are pre-transposed and
    # pre-fused at init, so no per-call transpose and no hidden intermediate.
    y = jnp.dot(x.astype(w_ref.dtype), w_ref[...],
                preferred_element_type=jnp.float32,
                precision=precision) + b_ref[...]
    # L2 normalize along the feature axis.  rsqrt(max(sq, eps^2)) equals
    # 1 / max(||y||, eps) and runs on the otherwise-idle EUP slot; the whole
    # epilogue stays in f32 (safe on v5e which lacks bf16 VPU/EUP).
    sq = jnp.sum(y * y, axis=-1, keepdims=True)
    inv = lax.rsqrt(jnp.maximum(sq, 1e-24))
    o_ref[...] = (y * inv).astype(o_ref.dtype)


def _call_fused_linear_normalize(x, w_f, b_f):
    """x: [B, d_in]; w_f: [d_in, d_out] fused weight; b_f: [1, d_out] f32 bias."""
    B, d_in = x.shape
    d_out = w_f.shape[1]
    elt = x.dtype.itemsize

    weight_bytes = int(w_f.size) * w_f.dtype.itemsize + int(b_f.size) * b_f.dtype.itemsize
    vmem_budget = _vmem_budget_bytes()
    tb = _pick_tb(B, d_in, d_out, elt, weight_bytes, vmem_budget)
    grid = (pl.cdiv(B, tb),)

    # VMEM accounting: (possibly double-buffered) weights + double-buffered
    # x / out tiles + f32 y intermediate + x cast copy + small headroom.
    need = (2 * weight_bytes + 2 * tb * d_in * elt + 2 * tb * d_out * elt
            + tb * d_out * 4 + tb * d_in * 4 + (2 << 20))
    vmem_limit = int(min(max(need, 32 << 20), vmem_budget))

    precision = (lax.Precision.DEFAULT if w_f.dtype == jnp.bfloat16
                 else lax.Precision.HIGHEST)
    kernel = functools.partial(_fused_linear_normalize_kernel, precision=precision)

    cost = pl.CostEstimate(
        flops=int(2 * B * d_in * d_out),
        transcendentals=int(B),
        bytes_accessed=int(weight_bytes + (B * d_in + B * d_out) * elt),
    )

    def build(single_buffer_weights):
        if single_buffer_weights:
            # Constant index_map -> weights never re-fetched; single-buffering
            # halves their VMEM footprint (matters most on v7x's 64 MiB).
            w_spec = pl.BlockSpec(w_f.shape, lambda i: (0, 0),
                                  pipeline_mode=pl.Buffered(1))
            b_spec = pl.BlockSpec(b_f.shape, lambda i: (0, 0),
                                  pipeline_mode=pl.Buffered(1))
        else:
            w_spec = pl.BlockSpec(w_f.shape, lambda i: (0, 0))
            b_spec = pl.BlockSpec(b_f.shape, lambda i: (0, 0))
        return pl.pallas_call(
            kernel,
            out_shape=jax.ShapeDtypeStruct((B, d_out), x.dtype),
            grid=grid,
            in_specs=[
                pl.BlockSpec((tb, d_in), lambda i: (i, 0)),
                w_spec,
                b_spec,
            ],
            out_specs=pl.BlockSpec((tb, d_out), lambda i: (i, 0)),
            compiler_params=pltpu.CompilerParams(
                dimension_semantics=("parallel",),
                vmem_limit_bytes=vmem_limit,
            ),
            cost_estimate=cost,
        )

    last_err = None
    for single_buf in (True, False):
        try:
            return build(single_buf)(x, w_f, b_f)
        except Exception as e:  # fall back if Buffered(1) is unsupported here
            last_err = e
    raise last_err


def _fuse_two_layer(w1, b1, w2, b2, weight_dtype):
    """PyTorch [out, in] weights of two chained Linears -> one fused weight/bias.

    There is no nonlinearity between the two layers in the original module, so
      (x @ w1.T + b1) @ w2.T + b2 == x @ (w1.T @ w2.T) + (b1 @ w2.T + b2).
    Done once at init in f32 HIGHEST precision; exact up to fp reassociation.
    """
    w_f = jnp.dot(w1.T, w2.T, precision=lax.Precision.HIGHEST)      # [d_in, d_out]
    b_f = jnp.dot(b1, w2.T, precision=lax.Precision.HIGHEST) + b2   # [d_out]
    return w_f.astype(weight_dtype), b_f.reshape(1, -1).astype(jnp.float32)


class ReversibleNetworkPallas:
    """JAX/Pallas port of the PyTorch `reversible_network` module."""

    def __init__(self, dims, key, *, use_bf16_weights=False):
        d = dims[0]
        keys = jax.random.split(key, 8)

        def linear_params(kw, kb, in_f, out_f):
            # PyTorch nn.Linear default init: U(-1/sqrt(in_f), 1/sqrt(in_f)).
            bound = 1.0 / float(in_f) ** 0.5
            w = jax.random.uniform(kw, (out_f, in_f), jnp.float32, -bound, bound)
            b = jax.random.uniform(kb, (out_f,), jnp.float32, -bound, bound)
            return w, b

        self.reduce1_w, self.reduce1_b = linear_params(keys[0], keys[1], d, d // 2)
        self.reduce2_w, self.reduce2_b = linear_params(keys[2], keys[3], d // 2, d)
        self.up1_w, self.up1_b = linear_params(keys[4], keys[5], d, d * 2)
        self.up2_w, self.up2_b = linear_params(keys[6], keys[7], d * 2, d)
        self.out_dim = d

        # Offline fusion of each two-layer chain (no activation between them).
        wdtype = jnp.bfloat16 if use_bf16_weights else jnp.float32
        self._reduce_fused = _fuse_two_layer(self.reduce1_w, self.reduce1_b,
                                             self.reduce2_w, self.reduce2_b, wdtype)
        self._up_fused = _fuse_two_layer(self.up1_w, self.up1_b,
                                         self.up2_w, self.up2_b, wdtype)

    def __call__(self, x, flag):
        # `flag` is a static Python bool (mirrors the PyTorch control flow).
        w_f, b_f = self._reduce_fused if flag else self._up_fused
        return _call_fused_linear_normalize(x, w_f, b_f)


def _reference(x, w1, b1, w2, b2):
    """Pure-JAX reference matching PyTorch semantics (weights in [out, in])."""
    h = jnp.dot(x, w1.T, precision=lax.Precision.HIGHEST) + b1
    y = jnp.dot(h, w2.T, precision=lax.Precision.HIGHEST) + b2
    norm = jnp.maximum(jnp.linalg.norm(y, axis=1, keepdims=True), 1e-12)
    return y / norm


if __name__ == "__main__":
    key = jax.random.PRNGKey(0)
    k_param, k_x = jax.random.split(key)

    dims = (32,)          # dims[0] = feature size
    batch = 8

    model = ReversibleNetworkPallas(dims, k_param)
    x = jax.random.normal(k_x, (batch, dims[0]), jnp.float32)

    # flag=True path: reduce2(reduce1(x)) then L2 normalize along dim=1.
    out_reduce = jax.block_until_ready(model(x, True))
    ref_reduce = _reference(x, model.reduce1_w, model.reduce1_b,
                            model.reduce2_w, model.reduce2_b)

    # flag=False path: up2(up1(x)) then L2 normalize along dim=1.
    out_up = jax.block_until_ready(model(x, False))
    ref_up = _reference(x, model.up1_w, model.up1_b,
                        model.up2_w, model.up2_b)

    assert out_reduce.shape == (batch, dims[0])
    assert out_up.shape == (batch, dims[0])
    assert jnp.allclose(out_reduce, ref_reduce, atol=1e-4, rtol=1e-4), \
        float(jnp.max(jnp.abs(out_reduce - ref_reduce)))
    assert jnp.allclose(out_up, ref_up, atol=1e-4, rtol=1e-4), \
        float(jnp.max(jnp.abs(out_up - ref_up)))

    print("KERNEL_OK")
</pallas_src>

<mosaic_0001>
module attributes {stable_mosaic.version = 11 : i64} {
  func.func @_fused_linear_normalize_kernel(%arg0: i32, %arg1: memref<8x32xf32, #tpu.memory_space<vmem>>, %arg2: memref<32x32xf32, #tpu.memory_space<vmem>>, %arg3: memref<1x32xf32, #tpu.memory_space<vmem>>, %arg4: memref<8x32xf32, #tpu.memory_space<vmem>>) attributes {dimension_semantics = [#tpu.dimension_semantics<parallel>], iteration_bounds = array<i64: 1>, scalar_prefetch = 0 : i64, scratch_operands = 0 : i64, tpu.core_type = #tpu.core_type<tc>, window_params = [{transform_indices = @transform_0, window_bounds = array<i64: 8, 32>}, {pipeline_mode = #tpu.pipeline_mode<synchronous>, transform_indices = @transform_1, window_bounds = array<i64: 32, 32>}, {pipeline_mode = #tpu.pipeline_mode<synchronous>, transform_indices = @transform_2, window_bounds = array<i64: 1, 32>}, {transform_indices = @transform_3, window_bounds = array<i64: 8, 32>}]} {
    %c0 = arith.constant 0 : index
    %c0_0 = arith.constant 0 : index
    %0 = vector.load %arg1[%c0, %c0_0] : memref<8x32xf32, #tpu.memory_space<vmem>>, vector<8x32xf32>
    %c0_1 = arith.constant 0 : index
    %c0_2 = arith.constant 0 : index
    %1 = vector.load %arg2[%c0_1, %c0_2] : memref<32x32xf32, #tpu.memory_space<vmem>>, vector<32x32xf32>
    %cst = arith.constant dense<0.000000e+00> : vector<8x32xf32>
    %2 = tpu.matmul %0, %1, %cst {dimension_numbers = #tpu.dot_dimension_numbers<[1], [0], [0], [1], [0, 0, 1, 1], [], []>, precision = #tpu.contract_precision<fp32>} : vector<8x32xf32>, vector<32x32xf32>, vector<8x32xf32> -> vector<8x32xf32>
    %c0_3 = arith.constant 0 : index
    %c0_4 = arith.constant 0 : index
    %3 = vector.load %arg3[%c0_3, %c0_4] : memref<1x32xf32, #tpu.memory_space<vmem>>, vector<1x32xf32>
    %4 = vector.broadcast %3 : vector<1x32xf32> to vector<8x32xf32>
    %5 = arith.addf %2, %4 : vector<8x32xf32>
    %6 = arith.mulf %5, %5 : vector<8x32xf32>
    %cst_5 = arith.constant dense<0.000000e+00> : vector<8xf32>
    %7 = vector.multi_reduction <add>, %6, %cst_5 [1] : vector<8x32xf32> to vector<8xf32>
    %8 = vector.shape_cast %7 : vector<8xf32> to vector<8x1xf32>
    %cst_6 = arith.constant 1.000000e-24 : f32
    %9 = vector.broadcast %cst_6 : f32 to vector<8x1xf32>
    %10 = arith.maximumf %8, %9 : vector<8x1xf32>
    %11 = math.rsqrt %10 : vector<8x1xf32>
    %12 = vector.broadcast %11 : vector<8x1xf32> to vector<8x32xf32>
    %13 = arith.mulf %5, %12 : vector<8x32xf32>
    %c0_7 = arith.constant 0 : index
    %c0_8 = arith.constant 0 : index
    %14 = vector.load %arg4[%c0_7, %c0_8] : memref<8x32xf32, #tpu.memory_space<vmem>>, vector<8x32xf32>
    tpu.vector_store %arg4[%c0_7, %c0_8], %13 {strides = array<i32>} : memref<8x32xf32, #tpu.memory_space<vmem>>, vector<8x32xf32>,
    return
  }
  func.func @transform_0(%arg0: i32) -> (i32, i32) {
    %c0_i32 = arith.constant 0 : i32
    %c0_i32_0 = arith.constant 0 : i32
    return %arg0, %c0_i32 : i32, i32
  }
  func.func @transform_1(%arg0: i32) -> (i32, i32) {
    %c0_i32 = arith.constant 0 : i32
    %c0_i32_0 = arith.constant 0 : i32
    %c0_i32_1 = arith.constant 0 : i32
    return %c0_i32, %c0_i32_0 : i32, i32
  }
  func.func @transform_2(%arg0: i32) -> (i32, i32) {
    %c0_i32 = arith.constant 0 : i32
    %c0_i32_0 = arith.constant 0 : i32
    %c0_i32_1 = arith.constant 0 : i32
    return %c0_i32, %c0_i32_0 : i32, i32
  }
  func.func @transform_3(%arg0: i32) -> (i32, i32) {
    %c0_i32 = arith.constant 0 : i32
    %c0_i32_0 = arith.constant 0 : i32
    return %arg0, %c0_i32 : i32, i32
  }
}

module attributes {stable_mosaic.version = 11 : i64} {
  func.func @_fused_linear_normalize_kernel(%arg0: i32, %arg1: memref<8x32xf32, #tpu.memory_space<vmem>>, %arg2: memref<32x32xf32, #tpu.memory_space<vmem>>, %arg3: memref<1x32xf32, #tpu.memory_space<vmem>>, %arg4: memref<8x32xf32, #tpu.memory_space<vmem>>) attributes {dimension_semantics = [#tpu.dimension_semantics<parallel>], iteration_bounds = array<i64: 1>, scalar_prefetch = 0 : i64, scratch_operands = 0 : i64, tpu.core_type = #tpu.core_type<tc>, window_params = [{transform_indices = @transform_0, window_bounds = array<i64: 8, 32>}, {pipeline_mode = #tpu.pipeline_mode<synchronous>, transform_indices = @transform_1, window_bounds = array<i64: 32, 32>}, {pipeline_mode = #tpu.pipeline_mode<synchronous>, transform_indices = @transform_2, window_bounds = array<i64: 1, 32>}, {transform_indices = @transform_3, window_bounds = array<i64: 8, 32>}]} {
    %c0 = arith.constant 0 : index
    %c0_0 = arith.constant 0 : index
    %0 = vector.load %arg1[%c0, %c0_0] : memref<8x32xf32, #tpu.memory_space<vmem>>, vector<8x32xf32>
    %c0_1 = arith.constant 0 : index
    %c0_2 = arith.constant 0 : index
    %1 = vector.load %arg2[%c0_1, %c0_2] : memref<32x32xf32, #tpu.memory_space<vmem>>, vector<32x32xf32>
    %cst = arith.constant dense<0.000000e+00> : vector<8x32xf32>
    %2 = tpu.matmul %0, %1, %cst {dimension_numbers = #tpu.dot_dimension_numbers<[1], [0], [0], [1], [0, 0, 1, 1], [], []>, precision = #tpu.contract_precision<fp32>} : vector<8x32xf32>, vector<32x32xf32>, vector<8x32xf32> -> vector<8x32xf32>
    %c0_3 = arith.constant 0 : index
    %c0_4 = arith.constant 0 : index
    %3 = vector.load %arg3[%c0_3, %c0_4] : memref<1x32xf32, #tpu.memory_space<vmem>>, vector<1x32xf32>
    %4 = vector.broadcast %3 : vector<1x32xf32> to vector<8x32xf32>
    %5 = arith.addf %2, %4 : vector<8x32xf32>
    %6 = arith.mulf %5, %5 : vector<8x32xf32>
    %cst_5 = arith.constant dense<0.000000e+00> : vector<8xf32>
    %7 = vector.multi_reduction <add>, %6, %cst_5 [1] : vector<8x32xf32> to vector<8xf32>
    %8 = vector.shape_cast %7 : vector<8xf32> to vector<8x1xf32>
    %cst_6 = arith.constant 1.000000e-24 : f32
    %9 = vector.broadcast %cst_6 : f32 to vector<8x1xf32>
    %10 = arith.maximumf %8, %9 : vector<8x1xf32>
    %11 = math.rsqrt %10 : vector<8x1xf32>
    %12 = vector.broadcast %11 : vector<8x1xf32> to vector<8x32xf32>
    %13 = arith.mulf %5, %12 : vector<8x32xf32>
    %c0_7 = arith.constant 0 : index
    %c0_8 = arith.constant 0 : index
    %14 = vector.load %arg4[%c0_7, %c0_8] : memref<8x32xf32, #tpu.memory_space<vmem>>, vector<8x32xf32>
    tpu.vector_store %arg4[%c0_7, %c0_8], %13 {strides = array<i32>} : memref<8x32xf32, #tpu.memory_space<vmem>>, vector<8x32xf32>,
    return
  }
  func.func @transform_0(%arg0: i32) -> (i32, i32) {
    %c0_i32 = arith.constant 0 : i32
    %c0_i32_0 = arith.constant 0 : i32
    return %arg0, %c0_i32 : i32, i32
  }
  func.func @transform_1(%arg0: i32) -> (i32, i32) {
    %c0_i32 = arith.constant 0 : i32
    %c0_i32_0 = arith.constant 0 : i32
    %c0_i32_1 = arith.constant 0 : i32
    return %c0_i32, %c0_i32_0 : i32, i32
  }
  func.func @transform_2(%arg0: i32) -> (i32, i32) {
    %c0_i32 = arith.constant 0 : i32
    %c0_i32_0 = arith.constant 0 : i32
    %c0_i32_1 = arith.constant 0 : i32
    return %c0_i32, %c0_i32_0 : i32, i32
  }
  func.func @transform_3(%arg0: i32) -> (i32, i32) {
    %c0_i32 = arith.constant 0 : i32
    %c0_i32_0 = arith.constant 0 : i32
    return %arg0, %c0_i32 : i32, i32
  }
}

</mosaic_0001>

<llo_original>
// kernel: tpu_custom_call.1
$region0: #{tpu_custom_call.1}
  #allocation0 [shape = 'u32[]', space=smem, size = 0x4, offset = 0x4, fixed_abs, tag = 'smem constant byte address 0x4 - core index']
  #allocation1 [shape = 'u32[144,128]{1,0:T(1,128)}', space=vmem, size = 0x12000, scoped, tag = 'internal scratch']
  %s0 = inlined_call_operand.hbm [shape: f32[8,32], index: 0, kind: input, shape index: {}]
  %s1 = inlined_call_operand.hbm [shape: f32[32,32], index: 1, kind: input, shape index: {}]
  %s2 = inlined_call_operand.vmem [shape: f32[1,32], index: 2, kind: input, shape index: {}]
  %s3 = inlined_call_operand.hbm [shape: f32[8,32], index: 3, kind: output, shape index: {}]
  %s4 = sld [smem:[#allocation0]]
  $region30: #{tpu_custom_call.1} parent=0
    _
  %s6 = ssub.s32 1, %s4
  %s7 = scalar_select 0, %s6, %s4
  $region1: #{tpu_custom_call.1} parent=0
    #allocation2 [shape = 'u8[4096]{0}', space=vmem, size = 0x1000, scoped, tag = 'input window, operand 0, single buffered']
    #allocation3 [shape = 's32[1]{0}', space=sflag, size = 0x4, scoped, tag = 'scoped memory for tpu_custom_call.1']
    #allocation4 [shape = 's32[1]{0}', space=sflag, size = 0x4, scoped, tag = 'scoped memory for tpu_custom_call.1']
    #allocation5 [shape = 'u8[16384]{0}', space=vmem, size = 0x4000, scoped, tag = 'input window, operand 1, single buffered']
    #allocation6 [shape = 's32[1]{0}', space=sflag, size = 0x4, scoped, tag = 'scoped memory for tpu_custom_call.1']
    #allocation7 [shape = 'u8[4096]{0}', space=vmem, size = 0x1000, scoped, tag = 'output window, operand 0, single buffered']
    %8 = vsyncpa [#allocation3], 0
    %9 = vsyncpa [#allocation6], 0
    %10 = vsyncpa [#allocation4], 0
    // Predicated region
    $region2: #{tpu_custom_call.1} parent=1 // pred_check
      _
    $region3: #{tpu_custom_call.1} parent=1 // pred_check_branch
      %12 = sbr.rel (0) target = $region5
    $region4: #{tpu_custom_call.1} parent=1 // pred_region
      %s14 = ssub.s32 128, 128
      %15 = vsyncadd [#allocation3], %s14
      %s17 = sshll.u32 [#allocation2], 4
      %s18 = int_to_ptr.vmem [resolvable:$true] %s17
      %20 = dma.hbm_to_vmem [thread:$0]  %s0, 128, %s18, [#allocation3]
    $region5: #{tpu_custom_call.1} parent=1 // pred_fallthru
      _
    // Predicated region
    $region6: #{tpu_custom_call.1} parent=1 // pred_check
      _
    $region7: #{tpu_custom_call.1} parent=1 // pred_check_branch
      %22 = sbr.rel (0) target = $region9
    $region8: #{tpu_custom_call.1} parent=1 // pred_region
      %s24 = ssub.s32 512, 512
      %25 = vsyncadd [#allocation6], %s24
      %s26 = sshll.u32 [#allocation5], 4
      %s27 = int_to_ptr.vmem [resolvable:$true] %s26
      %32 = dma.hbm_to_vmem [thread:$0]  %s1, 512, %s27, [#allocation6], 128, 128, 8
    $region9: #{tpu_custom_call.1} parent=1 // pred_fallthru
      _
    // Predicated region
    $region10: #{tpu_custom_call.1} parent=1 // pred_check
      _
    $region11: #{tpu_custom_call.1} parent=1 // pred_check_branch
      %34 = sbr.rel (0) target = $region13
    $region12: #{tpu_custom_call.1} parent=1 // pred_region
      _
    $region13: #{tpu_custom_call.1} parent=1 // pred_fallthru
      _
    // Predicated region
    $region14: #{tpu_custom_call.1} parent=1 // pred_check
      _
    $region15: #{tpu_custom_call.1} parent=1 // pred_check_branch
      %36 = sbr.rel (0) target = $region17
    $region16: #{tpu_custom_call.1} parent=1 // pred_region
      %37 = dma.done [#allocation3], 128
    $region17: #{tpu_custom_call.1} parent=1 // pred_fallthru
      _
    // Predicated region
    $region18: #{tpu_custom_call.1} parent=1 // pred_check
      _
    $region19: #{tpu_custom_call.1} parent=1 // pred_check_branch
      %39 = sbr.rel (0) target = $region21
    $region20: #{tpu_custom_call.1} parent=1 // pred_region
      %40 = dma.done [#allocation6], 512
    $region21: #{tpu_custom_call.1} parent=1 // pred_fallthru
      _
    %v41 = vld [vmem:[#allocation2] sm:$0xff]
    %v42 = vld [vmem:[#allocation5] sm:$0xff]
    %v43 = vld [vmem:[#allocation5 + $0x8] sm:$0xff]
    %v44 = vld [vmem:[#allocation5 + $0x10] sm:$0xff]
    %v45 = vld [vmem:[#allocation5 + $0x18] sm:$0xff]
    %v46 = vld [vmem:[%s2] sm:$0x1]
    %v48 = vlaneseq
    %v49 = vshrl.u32 %v48, 7
    %v50 = vsub.s32 0, %v49
    %v51 = vrot.slane %v46, %v50
    %vm53 = vcmask 261120
    %v55 = vsel %vm53, %v41, 0
    %57 = vmatprep.subr.mxu0 0.0
    %v58 = vand.u32 %v42, 4294901760
    %59 = vmatpush1.msra.mxu0 %v58
    %60 = vmatprep.subr.mxu0 0.0
    %v61 = vand.u32 %v43, 4294901760
    %62 = vmatpush1.msra.mxu0 %v61
    %63 = vmatprep.subr.mxu0 0.0
    %v64 = vand.u32 %v44, 4294901760
    %65 = vmatpush1.msra.mxu0 %v64
    %66 = vmatprep.subr.mxu0 0.0
    %v67 = vand.u32 %v45, 4294901760
    %68 = vmatpush1.msra.mxu0 %v67
    %69 = vmatprep.subr.mxu0 0.0
    %70 = vmatpush1.msra.mxu0 0.0
    %71 = vmatprep.subr.mxu0 0.0
    %72 = vmatpush1.msra.mxu0 0.0
    %73 = vmatprep.subr.mxu0 0.0
    %74 = vmatpush1.msra.mxu0 0.0
    %75 = vmatprep.subr.mxu0 0.0
    %76 = vmatpush1.msra.mxu0 0.0
    %77 = vmatprep.subr.mxu0 0.0
    %78 = vmatpush1.msra.mxu0 0.0
    %79 = vmatprep.subr.mxu0 0.0
    %80 = vmatpush1.msra.mxu0 0.0
    %81 = vmatprep.subr.mxu0 0.0
    %82 = vmatpush1.msra.mxu0 0.0
    %83 = vmatprep.subr.mxu0 0.0
    %84 = vmatpush1.msra.mxu0 0.0
    %85 = vmatprep.subr.mxu0 0.0
    %86 = vmatpush1.msra.mxu0 0.0
    %87 = vmatprep.subr.mxu0 0.0
    %88 = vmatpush1.msra.mxu0 0.0
    %89 = vmatprep.subr.mxu0 0.0
    %90 = vmatpush1.msra.mxu0 0.0
    %91 = vmatprep.subr.mxu0 0.0
    %92 = vmatpush1.msra.mxu0 0.0
    %93 = vmatprep.subr.mxu0 0.0
    %94 = vmatpush1.msra.mxu0 0.0
    %95 = vmatprep.subr.mxu0 0.0
    %96 = vmatpush1.msra.mxu0 0.0
    %97 = vmatprep.subr.mxu0 0.0
    %98 = vmatpush1.msra.mxu0 0.0
    %99 = vmatprep.subr.mxu0 0.0
    %100 = vmatpush1.msra.mxu0 0.0
    %101 = vmatprep.subr.mxu0 0.0
    %102 = vmatpush1.msra.mxu0 0.0
    %103 = vmatprep.subr.mxu0 0.0
    %104 = vmatpush1.msra.mxu0 0.0
    %105 = vmatprep.subr.mxu0 0.0
    %106 = vmatpush1.msra.mxu0 0.0
    %107 = vmatprep.subr.mxu0 0.0
    %108 = vmatpush1.msra.mxu0 0.0
    %109 = vmatprep.subr.mxu0 0.0
    %110 = vmatpush1.msra.mxu0 0.0
    %111 = vmatprep.subr.mxu0 0.0
    %112 = vmatpush1.msra.mxu0 0.0
    %113 = vmatprep.subr.mxu0 0.0
    %114 = vmatpush1.msra.mxu0 0.0
    %115 = vmatprep.subr.mxu0 0.0
    %116 = vmatpush1.msra.mxu0 0.0
    %117 = vmatprep.subr.mxu0 0.0
    %118 = vmatpush1.msra.mxu0 0.0
    %119 = vmatprep.subr.mxu0 0.0
    %120 = vmatpush1.msra.mxu0 0.0
    %121 = vmatprep.subr.mxu0 0.0
    %122 = vmatpush1.msra.mxu0 0.0
    %123 = vmatprep.subr.mxu0 0.0
    %124 = vmatpush1.msra.mxu0 0.0
    %125 = vmatprep.mubr.f32.mxu0 0.0
    %v126 = vand.u32 %v55, 4294901760
    %v127 = vsub.f32 %v55, %v126
    %v128 = vand.u32 %v127, 4294901760
    %v129 = vsub.f32 %v127, %v128
    %v130 = vand.u32 %v129, 4294901760
    %131 = vmatmul.mubr.f32.gmra.mrb[0].mxu0 %v130
    %v132 = vpop.f32.mrb[0].mxu0
    %v133 = vadd.f32 %v51, %v132
    %v134 = vpop.f32.mrb[0].mxu0
    %135 = vdwg.mxu0
    %136 = vmatprep.subr.mxu0 0.0
    %v137 = vand.u32 %v42, 4294901760
    %v138 = vsub.f32 %v42, %v137
    %v139 = vand.u32 %v138, 4294901760
    %v140 = vsub.f32 %v138, %v139
    %v141 = vand.u32 %v140, 4294901760
    %142 = vmatpush1.msra.mxu0 %v141
    %143 = vmatprep.subr.mxu0 0.0
    %v144 = vand.u32 %v43, 4294901760
    %v145 = vsub.f32 %v43, %v144
    %v146 = vand.u32 %v145, 4294901760
    %v147 = vsub.f32 %v145, %v146
    %v148 = vand.u32 %v147, 4294901760
    %149 = vmatpush1.msra.mxu0 %v148
    %150 = vmatprep.subr.mxu0 0.0
    %v151 = vand.u32 %v44, 4294901760
    %v152 = vsub.f32 %v44, %v151
    %v153 = vand.u32 %v152, 4294901760
    %v154 = vsub.f32 %v152, %v153
    %v155 = vand.u32 %v154, 4294901760
    %156 = vmatpush1.msra.mxu0 %v155
    %157 = vmatprep.subr.mxu0 0.0
    %v158 = vand.u32 %v45, 4294901760
    %v159 = vsub.f32 %v45, %v158
    %v160 = vand.u32 %v159, 4294901760
    %v161 = vsub.f32 %v159, %v160
    %v162 = vand.u32 %v161, 4294901760
    %163 = vmatpush1.msra.mxu0 %v162
    %164 = vmatprep.subr.mxu0 0.0
    %165 = vmatpush1.msra.mxu0 0.0
    %166 = vmatprep.subr.mxu0 0.0
    %167 = vmatpush1.msra.mxu0 0.0
    %168 = vmatprep.subr.mxu0 0.0
    %169 = vmatpush1.msra.mxu0 0.0
    %170 = vmatprep.subr.mxu0 0.0
    %171 = vmatpush1.msra.mxu0 0.0
    %172 = vmatprep.subr.mxu0 0.0
    %173 = vmatpush1.msra.mxu0 0.0
    %174 = vmatprep.subr.mxu0 0.0
    %175 = vmatpush1.msra.mxu0 0.0
    %176 = vmatprep.subr.mxu0 0.0
    %177 = vmatpush1.msra.mxu0 0.0
    %178 = vmatprep.subr.mxu0 0.0
    %179 = vmatpush1.msra.mxu0 0.0
    %180 = vmatprep.subr.mxu0 0.0
    %181 = vmatpush1.msra.mxu0 0.0
    %182 = vmatprep.subr.mxu0 0.0
    %183 = vmatpush1.msra.mxu0 0.0
    %184 = vmatprep.subr.mxu0 0.0
    %185 = vmatpush1.msra.mxu0 0.0
    %186 = vmatprep.subr.mxu0 0.0
    %187 = vmatpush1.msra.mxu0 0.0
    %188 = vmatprep.subr.mxu0 0.0
    %189 = vmatpush1.msra.mxu0 0.0
    %190 = vmatprep.subr.mxu0 0.0
    %191 = vmatpush1.msra.mxu0 0.0
    %192 = vmatprep.subr.mxu0 0.0
    %193 = vmatpush1.msra.mxu0 0.0
    %194 = vmatprep.subr.mxu0 0.0
    %195 = vmatpush1.msra.mxu0 0.0
    %196 = vmatprep.subr.mxu0 0.0
    %197 = vmatpush1.msra.mxu0 0.0
    %198 = vmatprep.subr.mxu0 0.0
    %199 = vmatpush1.msra.mxu0 0.0
    %200 = vmatprep.subr.mxu0 0.0
    %201 = vmatpush1.msra.mxu0 0.0
    %202 = vmatprep.subr.mxu0 0.0
    %203 = vmatpush1.msra.mxu0 0.0
    %204 = vmatprep.subr.mxu0 0.0
    %205 = vmatpush1.msra.mxu0 0.0
    %206 = vmatprep.subr.mxu0 0.0
    %207 = vmatpush1.msra.mxu0 0.0
    %208 = vmatprep.subr.mxu0 0.0
    %209 = vmatpush1.msra.mxu0 0.0
    %210 = vmatprep.subr.mxu0 0.0
    %211 = vmatpush1.msra.mxu0 0.0
    %212 = vmatprep.subr.mxu0 0.0
    %213 = vmatpush1.msra.mxu0 0.0
    %214 = vmatprep.subr.mxu0 0.0
    %215 = vmatpush1.msra.mxu0 0.0
    %216 = vmatprep.subr.mxu0 0.0
    %217 = vmatpush1.msra.mxu0 0.0
    %218 = vmatprep.subr.mxu0 0.0
    %219 = vmatpush1.msra.mxu0 0.0
    %220 = vmatprep.mubr.f32.mxu0 0.0
    %v221 = vand.u32 %v55, 4294901760
    %222 = vmatmul.mubr.f32.gmra.mrb[0].mxu0 %v221
    %v223 = vpop.f32.mrb[0].mxu0
    %v224 = vadd.f32 %v133, %v223
    %v225 = vpop.f32.mrb[0].mxu0
    %226 = vdwg.mxu0
    %227 = vmatprep.subr.mxu0 0.0
    %v228 = vand.u32 %v42, 4294901760
    %v229 = vsub.f32 %v42, %v228
    %230 = vmatpush1.msra.mxu0 %v229
    %231 = vmatprep.subr.mxu0 0.0
    %v232 = vand.u32 %v43, 4294901760
    %v233 = vsub.f32 %v43, %v232
    %234 = vmatpush1.msra.mxu0 %v233
    %235 = vmatprep.subr.mxu0 0.0
    %v236 = vand.u32 %v44, 4294901760
    %v237 = vsub.f32 %v44, %v236
    %238 = vmatpush1.msra.mxu0 %v237
    %239 = vmatprep.subr.mxu0 0.0
    %v240 = vand.u32 %v45, 4294901760
    %v241 = vsub.f32 %v45, %v240
    %242 = vmatpush1.msra.mxu0 %v241
    %243 = vmatprep.subr.mxu0 0.0
    %244 = vmatpush1.msra.mxu0 0.0
    %245 = vmatprep.subr.mxu0 0.0
    %246 = vmatpush1.msra.mxu0 0.0
    %247 = vmatprep.subr.mxu0 0.0
    %248 = vmatpush1.msra.mxu0 0.0
    %249 = vmatprep.subr.mxu0 0.0
    %250 = vmatpush1.msra.mxu0 0.0
    %251 = vmatprep.subr.mxu0 0.0
    %252 = vmatpush1.msra.mxu0 0.0
    %253 = vmatprep.subr.mxu0 0.0
    %254 = vmatpush1.msra.mxu0 0.0
    %255 = vmatprep.subr.mxu0 0.0
    %256 = vmatpush1.msra.mxu0 0.0
    %257 = vmatprep.subr.mxu0 0.0
    %258 = vmatpush1.msra.mxu0 0.0
    %259 = vmatprep.subr.mxu0 0.0
    %260 = vmatpush1.msra.mxu0 0.0
    %261 = vmatprep.subr.mxu0 0.0
    %262 = vmatpush1.msra.mxu0 0.0
    %263 = vmatprep.subr.mxu0 0.0
    %264 = vmatpush1.msra.mxu0 0.0
    %265 = vmatprep.subr.mxu0 0.0
    %266 = vmatpush1.msra.mxu0 0.0
    %267 = vmatprep.subr.mxu0 0.0
    %268 = vmatpush1.msra.mxu0 0.0
    %269 = vmatprep.subr.mxu0 0.0
    %270 = vmatpush1.msra.mxu0 0.0
    %271 = vmatprep.subr.mxu0 0.0
    %272 = vmatpush1.msra.mxu0 0.0
    %273 = vmatprep.subr.mxu0 0.0
    %274 = vmatpush1.msra.mxu0 0.0
    %275 = vmatprep.subr.mxu0 0.0
    %276 = vmatpush1.msra.mxu0 0.0
    %277 = vmatprep.subr.mxu0 0.0
    %278 = vmatpush1.msra.mxu0 0.0
    %279 = vmatprep.subr.mxu0 0.0
    %280 = vmatpush1.msra.mxu0 0.0
    %281 = vmatprep.subr.mxu0 0.0
    %282 = vmatpush1.msra.mxu0 0.0
    %283 = vmatprep.subr.mxu0 0.0
    %284 = vmatpush1.msra.mxu0 0.0
    %285 = vmatprep.subr.mxu0 0.0
    %286 = vmatpush1.msra.mxu0 0.0
    %287 = vmatprep.subr.mxu0 0.0
    %288 = vmatpush1.msra.mxu0 0.0
    %289 = vmatprep.subr.mxu0 0.0
    %290 = vmatpush1.msra.mxu0 0.0
    %291 = vmatprep.subr.mxu0 0.0
    %292 = vmatpush1.msra.mxu0 0.0
    %293 = vmatprep.subr.mxu0 0.0
    %294 = vmatpush1.msra.mxu0 0.0
    %295 = vmatprep.subr.mxu0 0.0
    %296 = vmatpush1.msra.mxu0 0.0
    %297 = vmatprep.subr.mxu0 0.0
    %298 = vmatpush1.msra.mxu0 0.0
    %299 = vmatprep.mubr.f32.mxu0 0.0
    %v300 = vand.u32 %v55, 4294901760
    %v301 = vsub.f32 %v55, %v300
    %302 = vmatmul.mubr.f32.gmra.mrb[0].mxu0 %v301
    %v303 = vpop.f32.mrb[0].mxu0
    %v304 = vadd.f32 %v224, %v303
    %v305 = vpop.f32.mrb[0].mxu0
    %306 = vdwg.mxu0
    %307 = vmatprep.subr.mxu0 0.0
    %v308 = vand.u32 %v42, 4294901760
    %309 = vmatpush1.msra.mxu0 %v308
    %310 = vmatprep.subr.mxu0 0.0
    %v311 = vand.u32 %v43, 4294901760
    %312 = vmatpush1.msra.mxu0 %v311
    %313 = vmatprep.subr.mxu0 0.0
    %v314 = vand.u32 %v44, 4294901760
    %315 = vmatpush1.msra.mxu0 %v314
    %316 = vmatprep.subr.mxu0 0.0
    %v317 = vand.u32 %v45, 4294901760
    %318 = vmatpush1.msra.mxu0 %v317
    %319 = vmatprep.subr.mxu0 0.0
    %320 = vmatpush1.msra.mxu0 0.0
    %321 = vmatprep.subr.mxu0 0.0
    %322 = vmatpush1.msra.mxu0 0.0
    %323 = vmatprep.subr.mxu0 0.0
    %324 = vmatpush1.msra.mxu0 0.0
    %325 = vmatprep.subr.mxu0 0.0
    %326 = vmatpush1.msra.mxu0 0.0
    %327 = vmatprep.subr.mxu0 0.0
    %328 = vmatpush1.msra.mxu0 0.0
    %329 = vmatprep.subr.mxu0 0.0
    %330 = vmatpush1.msra.mxu0 0.0
    %331 = vmatprep.subr.mxu0 0.0
    %332 = vmatpush1.msra.mxu0 0.0
    %333 = vmatprep.subr.mxu0 0.0
    %334 = vmatpush1.msra.mxu0 0.0
    %335 = vmatprep.subr.mxu0 0.0
    %336 = vmatpush1.msra.mxu0 0.0
    %337 = vmatprep.subr.mxu0 0.0
    %338 = vmatpush1.msra.mxu0 0.0
    %339 = vmatprep.subr.mxu0 0.0
    %340 = vmatpush1.msra.mxu0 0.0
    %341 = vmatprep.subr.mxu0 0.0
    %342 = vmatpush1.msra.mxu0 0.0
    %343 = vmatprep.subr.mxu0 0.0
    %344 = vmatpush1.msra.mxu0 0.0
    %345 = vmatprep.subr.mxu0 0.0
    %346 = vmatpush1.msra.mxu0 0.0
    %347 = vmatprep.subr.mxu0 0.0
    %348 = vmatpush1.msra.mxu0 0.0
    %349 = vmatprep.subr.mxu0 0.0
    %350 = vmatpush1.msra.mxu0 0.0
    %351 = vmatprep.subr.mxu0 0.0
    %352 = vmatpush1.msra.mxu0 0.0
    %353 = vmatprep.subr.mxu0 0.0
    %354 = vmatpush1.msra.mxu0 0.0
    %355 = vmatprep.subr.mxu0 0.0
    %356 = vmatpush1.msra.mxu0 0.0
    %357 = vmatprep.subr.mxu0 0.0
    %358 = vmatpush1.msra.mxu0 0.0
    %359 = vmatprep.subr.mxu0 0.0
    %360 = vmatpush1.msra.mxu0 0.0
    %361 = vmatprep.subr.mxu0 0.0
    %362 = vmatpush1.msra.mxu0 0.0
    %363 = vmatprep.subr.mxu0 0.0
    %364 = vmatpush1.msra.mxu0 0.0
    %365 = vmatprep.subr.mxu0 0.0
    %366 = vmatpush1.msra.mxu0 0.0
    %367 = vmatprep.subr.mxu0 0.0
    %368 = vmatpush1.msra.mxu0 0.0
    %369 = vmatprep.subr.mxu0 0.0
    %370 = vmatpush1.msra.mxu0 0.0
    %371 = vmatprep.subr.mxu0 0.0
    %372 = vmatpush1.msra.mxu0 0.0
    %373 = vmatprep.subr.mxu0 0.0
    %374 = vmatpush1.msra.mxu0 0.0
    %375 = vmatprep.mubr.f32.mxu0 0.0
    %v376 = vand.u32 %v55, 4294901760
    %v377 = vsub.f32 %v55, %v376
    %v378 = vand.u32 %v377, 4294901760
    %379 = vmatmul.mubr.f32.gmra.mrb[0].mxu0 %v378
    %v380 = vpop.f32.mrb[0].mxu0
    %v381 = vadd.f32 %v304, %v380
    %v382 = vpop.f32.mrb[0].mxu0
    %383 = vdwg.mxu0
    %384 = vmatprep.subr.mxu0 0.0
    %v385 = vand.u32 %v42, 4294901760
    %v386 = vsub.f32 %v42, %v385
    %v387 = vand.u32 %v386, 4294901760
    %388 = vmatpush1.msra.mxu0 %v387
    %389 = vmatprep.subr.mxu0 0.0
    %v390 = vand.u32 %v43, 4294901760
    %v391 = vsub.f32 %v43, %v390
    %v392 = vand.u32 %v391, 4294901760
    %393 = vmatpush1.msra.mxu0 %v392
    %394 = vmatprep.subr.mxu0 0.0
    %v395 = vand.u32 %v44, 4294901760
    %v396 = vsub.f32 %v44, %v395
    %v397 = vand.u32 %v396, 4294901760
    %398 = vmatpush1.msra.mxu0 %v397
    %399 = vmatprep.subr.mxu0 0.0
    %v400 = vand.u32 %v45, 4294901760
    %v401 = vsub.f32 %v45, %v400
    %v402 = vand.u32 %v401, 4294901760
    %403 = vmatpush1.msra.mxu0 %v402
    %404 = vmatprep.subr.mxu0 0.0
    %405 = vmatpush1.msra.mxu0 0.0
    %406 = vmatprep.subr.mxu0 0.0
    %407 = vmatpush1.msra.mxu0 0.0
    %408 = vmatprep.subr.mxu0 0.0
    %409 = vmatpush1.msra.mxu0 0.0
    %410 = vmatprep.subr.mxu0 0.0
    %411 = vmatpush1.msra.mxu0 0.0
    %412 = vmatprep.subr.mxu0 0.0
    %413 = vmatpush1.msra.mxu0 0.0
    %414 = vmatprep.subr.mxu0 0.0
    %415 = vmatpush1.msra.mxu0 0.0
    %416 = vmatprep.subr.mxu0 0.0
    %417 = vmatpush1.msra.mxu0 0.0
    %418 = vmatprep.subr.mxu0 0.0
    %419 = vmatpush1.msra.mxu0 0.0
    %420 = vmatprep.subr.mxu0 0.0
    %421 = vmatpush1.msra.mxu0 0.0
    %422 = vmatprep.subr.mxu0 0.0
    %423 = vmatpush1.msra.mxu0 0.0
    %424 = vmatprep.subr.mxu0 0.0
    %425 = vmatpush1.msra.mxu0 0.0
    %426 = vmatprep.subr.mxu0 0.0
    %427 = vmatpush1.msra.mxu0 0.0
    %428 = vmatprep.subr.mxu0 0.0
    %429 = vmatpush1.msra.mxu0 0.0
    %430 = vmatprep.subr.mxu0 0.0
    %431 = vmatpush1.msra.mxu0 0.0
    %432 = vmatprep.subr.mxu0 0.0
    %433 = vmatpush1.msra.mxu0 0.0
    %434 = vmatprep.subr.mxu0 0.0
    %435 = vmatpush1.msra.mxu0 0.0
    %436 = vmatprep.subr.mxu0 0.0
    %437 = vmatpush1.msra.mxu0 0.0
    %438 = vmatprep.subr.mxu0 0.0
    %439 = vmatpush1.msra.mxu0 0.0
    %440 = vmatprep.subr.mxu0 0.0
    %441 = vmatpush1.msra.mxu0 0.0
    %442 = vmatprep.subr.mxu0 0.0
    %443 = vmatpush1.msra.mxu0 0.0
    %444 = vmatprep.subr.mxu0 0.0
    %445 = vmatpush1.msra.mxu0 0.0
    %446 = vmatprep.subr.mxu0 0.0
    %447 = vmatpush1.msra.mxu0 0.0
    %448 = vmatprep.subr.mxu0 0.0
    %449 = vmatpush1.msra.mxu0 0.0
    %450 = vmatprep.subr.mxu0 0.0
    %451 = vmatpush1.msra.mxu0 0.0
    %452 = vmatprep.subr.mxu0 0.0
    %453 = vmatpush1.msra.mxu0 0.0
    %454 = vmatprep.subr.mxu0 0.0
    %455 = vmatpush1.msra.mxu0 0.0
    %456 = vmatprep.subr.mxu0 0.0
    %457 = vmatpush1.msra.mxu0 0.0
    %458 = vmatprep.subr.mxu0 0.0
    %459 = vmatpush1.msra.mxu0 0.0
    %460 = vmatprep.mubr.f32.mxu0 0.0
    %v461 = vand.u32 %v55, 4294901760
    %462 = vmatmul.mubr.f32.gmra.mrb[0].mxu0 %v461
    %v463 = vpop.f32.mrb[0].mxu0
    %v464 = vadd.f32 %v381, %v463
    %v465 = vpop.f32.mrb[0].mxu0
    %466 = vdwg.mxu0
    %467 = vmatprep.subr.mxu0 0.0
    %v468 = vand.u32 %v42, 4294901760
    %469 = vmatpush1.msra.mxu0 %v468
    %470 = vmatprep.subr.mxu0 0.0
    %v471 = vand.u32 %v43, 4294901760
    %472 = vmatpush1.msra.mxu0 %v471
    %473 = vmatprep.subr.mxu0 0.0
    %v474 = vand.u32 %v44, 4294901760
    %475 = vmatpush1.msra.mxu0 %v474
    %476 = vmatprep.subr.mxu0 0.0
    %v477 = vand.u32 %v45, 4294901760
    %478 = vmatpush1.msra.mxu0 %v477
    %479 = vmatprep.subr.mxu0 0.0
    %480 = vmatpush1.msra.mxu0 0.0
    %481 = vmatprep.subr.mxu0 0.0
    %482 = vmatpush1.msra.mxu0 0.0
    %483 = vmatprep.subr.mxu0 0.0
    %484 = vmatpush1.msra.mxu0 0.0
    %485 = vmatprep.subr.mxu0 0.0
    %486 = vmatpush1.msra.mxu0 0.0
    %487 = vmatprep.subr.mxu0 0.0
    %488 = vmatpush1.msra.mxu0 0.0
    %489 = vmatprep.subr.mxu0 0.0
    %490 = vmatpush1.msra.mxu0 0.0
    %491 = vmatprep.subr.mxu0 0.0
    %492 = vmatpush1.msra.mxu0 0.0
    %493 = vmatprep.subr.mxu0 0.0
    %494 = vmatpush1.msra.mxu0 0.0
    %495 = vmatprep.subr.mxu0 0.0
    %496 = vmatpush1.msra.mxu0 0.0
    %497 = vmatprep.subr.mxu0 0.0
    %498 = vmatpush1.msra.mxu0 0.0
    %499 = vmatprep.subr.mxu0 0.0
    %500 = vmatpush1.msra.mxu0 0.0
    %501 = vmatprep.subr.mxu0 0.0
    %502 = vmatpush1.msra.mxu0 0.0
    %503 = vmatprep.subr.mxu0 0.0
    %504 = vmatpush1.msra.mxu0 0.0
    %505 = vmatprep.subr.mxu0 0.0
    %506 = vmatpush1.msra.mxu0 0.0
    %507 = vmatprep.subr.mxu0 0.0
    %508 = vmatpush1.msra.mxu0 0.0
    %509 = vmatprep.subr.mxu0 0.0
    %510 = vmatpush1.msra.mxu0 0.0
    %511 = vmatprep.subr.mxu0 0.0
    %512 = vmatpush1.msra.mxu0 0.0
    %513 = vmatprep.subr.mxu0 0.0
    %514 = vmatpush1.msra.mxu0 0.0
    %515 = vmatprep.subr.mxu0 0.0
    %516 = vmatpush1.msra.mxu0 0.0
    %517 = vmatprep.subr.mxu0 0.0
    %518 = vmatpush1.msra.mxu0 0.0
    %519 = vmatprep.subr.mxu0 0.0
    %520 = vmatpush1.msra.mxu0 0.0
    %521 = vmatprep.subr.mxu0 0.0
    %522 = vmatpush1.msra.mxu0 0.0
    %523 = vmatprep.subr.mxu0 0.0
    %524 = vmatpush1.msra.mxu0 0.0
    %525 = vmatprep.subr.mxu0 0.0
    %526 = vmatpush1.msra.mxu0 0.0
    %527 = vmatprep.subr.mxu0 0.0
    %528 = vmatpush1.msra.mxu0 0.0
    %529 = vmatprep.subr.mxu0 0.0
    %530 = vmatpush1.msra.mxu0 0.0
    %531 = vmatprep.subr.mxu0 0.0
    %532 = vmatpush1.msra.mxu0 0.0
    %533 = vmatprep.subr.mxu0 0.0
    %534 = vmatpush1.msra.mxu0 0.0
    %535 = vmatprep.mubr.f32.mxu0 0.0
    %v536 = vand.u32 %v55, 4294901760
    %537 = vmatmul.mubr.f32.gmra.mrb[0].mxu0 %v536
    %v538 = vpop.f32.mrb[0].mxu0
    %v539 = vadd.f32 %v464, %v538
    %v540 = vpop.f32.mrb[0].mxu0
    %541 = vdwg.mxu0
    %v542 = vmul.f32 %v539, %v539
    %v543 = vsel %vm53, %v542, 0.0
    %544 = vadd.xlane.f32.xlu0 %v543
    %v545 = vpop.xlane.xlu0 %544
    %v546 = vmax.f32 %v545, 1e-24
    %v547 = vrsqrt.pop %v546
    %v548 = vmul.f32 %v539, %v547
    %549 = vst.msk [vmem:[#allocation7] sm:$0xff] %vm53, %v548
    // Predicated region
    $region22: #{tpu_custom_call.1} parent=1 // pred_check
      _
    $region23: #{tpu_custom_call.1} parent=1 // pred_check_branch
      %551 = sbr.rel (0) target = $region25
    $region24: #{tpu_custom_call.1} parent=1 // pred_region
      %s553 = ssub.s32 128, 128
      %554 = vsyncadd [#allocation4], %s553
      %s556 = sshll.u32 [#allocation7], 4
      %s557 = int_to_ptr.vmem [resolvable:$true] %s556
      %559 = dma.vmem_to_hbm [thread:$0]  %s557, 128, %s3, [#allocation4]
    $region25: #{tpu_custom_call.1} parent=1 // pred_fallthru
      _
    // Predicated region
    $region26: #{tpu_custom_call.1} parent=1 // pred_check
      _
    $region27: #{tpu_custom_call.1} parent=1 // pred_check_branch
      %561 = sbr.rel (0) target = $region29
    $region28: #{tpu_custom_call.1} parent=1 // pred_region
      %562 = dma.done [#allocation4], 128
    $region29: #{tpu_custom_call.1} parent=1 // pred_fallthru
      _
    %563 = vsyncpa [#allocation3], 1
    %564 = vsyncpa [#allocation6], 1
    %565 = vsyncpa [#allocation4], 1

// kernel: tpu_custom_call.1
$region0: #{tpu_custom_call.1}
  #allocation0 [shape = 'u32[]', space=smem, size = 0x4, offset = 0x4, fixed_abs, tag = 'smem constant byte address 0x4 - core index']
  #allocation1 [shape = 'u32[144,128]{1,0:T(1,128)}', space=vmem, size = 0x12000, scoped, tag = 'internal scratch']
  %s0 = inlined_call_operand.hbm [shape: f32[8,32], index: 0, kind: input, shape index: {}]
  %s1 = inlined_call_operand.hbm [shape: f32[32,32], index: 1, kind: input, shape index: {}]
  %s2 = inlined_call_operand.vmem [shape: f32[1,32], index: 2, kind: input, shape index: {}]
  %s3 = inlined_call_operand.hbm [shape: f32[8,32], index: 3, kind: output, shape index: {}]
  %s4 = sld [smem:[#allocation0]]
  $region30: #{tpu_custom_call.1} parent=0
    _
  %s6 = ssub.s32 1, %s4
  %s7 = scalar_select 0, %s6, %s4
  $region1: #{tpu_custom_call.1} parent=0
    #allocation2 [shape = 'u8[4096]{0}', space=vmem, size = 0x1000, scoped, tag = 'input window, operand 0, single buffered']
    #allocation3 [shape = 's32[1]{0}', space=sflag, size = 0x4, scoped, tag = 'scoped memory for tpu_custom_call.1']
    #allocation4 [shape = 's32[1]{0}', space=sflag, size = 0x4, scoped, tag = 'scoped memory for tpu_custom_call.1']
    #allocation5 [shape = 'u8[16384]{0}', space=vmem, size = 0x4000, scoped, tag = 'input window, operand 1, single buffered']
    #allocation6 [shape = 's32[1]{0}', space=sflag, size = 0x4, scoped, tag = 'scoped memory for tpu_custom_call.1']
    #allocation7 [shape = 'u8[4096]{0}', space=vmem, size = 0x1000, scoped, tag = 'output window, operand 0, single buffered']
    %8 = vsyncpa [#allocation3], 0
    %9 = vsyncpa [#allocation6], 0
    %10 = vsyncpa [#allocation4], 0
    // Predicated region
    $region2: #{tpu_custom_call.1} parent=1 // pred_check
      _
    $region3: #{tpu_custom_call.1} parent=1 // pred_check_branch
      %12 = sbr.rel (0) target = $region5
    $region4: #{tpu_custom_call.1} parent=1 // pred_region
      %s14 = ssub.s32 128, 128
      %15 = vsyncadd [#allocation3], %s14
      %s17 = sshll.u32 [#allocation2], 4
      %s18 = int_to_ptr.vmem [resolvable:$true] %s17
      %20 = dma.hbm_to_vmem [thread:$0]  %s0, 128, %s18, [#allocation3]
    $region5: #{tpu_custom_call.1} parent=1 // pred_fallthru
      _
    // Predicated region
    $region6: #{tpu_custom_call.1} parent=1 // pred_check
      _
    $region7: #{tpu_custom_call.1} parent=1 // pred_check_branch
      %22 = sbr.rel (0) target = $region9
    $region8: #{tpu_custom_call.1} parent=1 // pred_region
      %s24 = ssub.s32 512, 512
      %25 = vsyncadd [#allocation6], %s24
      %s26 = sshll.u32 [#allocation5], 4
      %s27 = int_to_ptr.vmem [resolvable:$true] %s26
      %32 = dma.hbm_to_vmem [thread:$0]  %s1, 512, %s27, [#allocation6], 128, 128, 8
    $region9: #{tpu_custom_call.1} parent=1 // pred_fallthru
      _
    // Predicated region
    $region10: #{tpu_custom_call.1} parent=1 // pred_check
      _
    $region11: #{tpu_custom_call.1} parent=1 // pred_check_branch
      %34 = sbr.rel (0) target = $region13
    $region12: #{tpu_custom_call.1} parent=1 // pred_region
      _
    $region13: #{tpu_custom_call.1} parent=1 // pred_fallthru
      _
    // Predicated region
    $region14: #{tpu_custom_call.1} parent=1 // pred_check
      _
    $region15: #{tpu_custom_call.1} parent=1 // pred_check_branch
      %36 = sbr.rel (0) target = $region17
    $region16: #{tpu_custom_call.1} parent=1 // pred_region
      %37 = dma.done [#allocation3], 128
    $region17: #{tpu_custom_call.1} parent=1 // pred_fallthru
      _
    // Predicated region
    $region18: #{tpu_custom_call.1} parent=1 // pred_check
      _
    $region19: #{tpu_custom_call.1} parent=1 // pred_check_branch
      %39 = sbr.rel (0) target = $region21
    $region20: #{tpu_custom_call.1} parent=1 // pred_region
      %40 = dma.done [#allocation6], 512
    $region21: #{tpu_custom_call.1} parent=1 // pred_fallthru
      _
    %v41 = vld [vmem:[#allocation2] sm:$0xff]
    %v42 = vld [vmem:[#allocation5] sm:$0xff]
    %v43 = vld [vmem:[#allocation5 + $0x8] sm:$0xff]
    %v44 = vld [vmem:[#allocation5 + $0x10] sm:$0xff]
    %v45 = vld [vmem:[#allocation5 + $0x18] sm:$0xff]
    %v46 = vld [vmem:[%s2] sm:$0x1]
    %v48 = vlaneseq
    %v49 = vshrl.u32 %v48, 7
    %v50 = vsub.s32 0, %v49
    %v51 = vrot.slane %v46, %v50
    %vm53 = vcmask 261120
    %v55 = vsel %vm53, %v41, 0
    %57 = vmatprep.subr.mxu0 0.0
    %v58 = vand.u32 %v42, 4294901760
    %59 = vmatpush1.msra.mxu0 %v58
    %60 = vmatprep.subr.mxu0 0.0
    %v61 = vand.u32 %v43, 4294901760
    %62 = vmatpush1.msra.mxu0 %v61
    %63 = vmatprep.subr.mxu0 0.0
    %v64 = vand.u32 %v44, 4294901760
    %65 = vmatpush1.msra.mxu0 %v64
    %66 = vmatprep.subr.mxu0 0.0
    %v67 = vand.u32 %v45, 4294901760
    %68 = vmatpush1.msra.mxu0 %v67
    %69 = vmatprep.subr.mxu0 0.0
    %70 = vmatpush1.msra.mxu0 0.0
    %71 = vmatprep.subr.mxu0 0.0
    %72 = vmatpush1.msra.mxu0 0.0
    %73 = vmatprep.subr.mxu0 0.0
    %74 = vmatpush1.msra.mxu0 0.0
    %75 = vmatprep.subr.mxu0 0.0
    %76 = vmatpush1.msra.mxu0 0.0
    %77 = vmatprep.subr.mxu0 0.0
    %78 = vmatpush1.msra.mxu0 0.0
    %79 = vmatprep.subr.mxu0 0.0
    %80 = vmatpush1.msra.mxu0 0.0
    %81 = vmatprep.subr.mxu0 0.0
    %82 = vmatpush1.msra.mxu0 0.0
    %83 = vmatprep.subr.mxu0 0.0
    %84 = vmatpush1.msra.mxu0 0.0
    %85 = vmatprep.subr.mxu0 0.0
    %86 = vmatpush1.msra.mxu0 0.0
    %87 = vmatprep.subr.mxu0 0.0
    %88 = vmatpush1.msra.mxu0 0.0
    %89 = vmatprep.subr.mxu0 0.0
    %90 = vmatpush1.msra.mxu0 0.0
    %91 = vmatprep.subr.mxu0 0.0
    %92 = vmatpush1.msra.mxu0 0.0
    %93 = vmatprep.subr.mxu0 0.0
    %94 = vmatpush1.msra.mxu0 0.0
    %95 = vmatprep.subr.mxu0 0.0
    %96 = vmatpush1.msra.mxu0 0.0
    %97 = vmatprep.subr.mxu0 0.0
    %98 = vmatpush1.msra.mxu0 0.0
    %99 = vmatprep.subr.mxu0 0.0
    %100 = vmatpush1.msra.mxu0 0.0
    %101 = vmatprep.subr.mxu0 0.0
    %102 = vmatpush1.msra.mxu0 0.0
    %103 = vmatprep.subr.mxu0 0.0
    %104 = vmatpush1.msra.mxu0 0.0
    %105 = vmatprep.subr.mxu0 0.0
    %106 = vmatpush1.msra.mxu0 0.0
    %107 = vmatprep.subr.mxu0 0.0
    %108 = vmatpush1.msra.mxu0 0.0
    %109 = vmatprep.subr.mxu0 0.0
    %110 = vmatpush1.msra.mxu0 0.0
    %111 = vmatprep.subr.mxu0 0.0
    %112 = vmatpush1.msra.mxu0 0.0
    %113 = vmatprep.subr.mxu0 0.0
    %114 = vmatpush1.msra.mxu0 0.0
    %115 = vmatprep.subr.mxu0 0.0
    %116 = vmatpush1.msra.mxu0 0.0
    %117 = vmatprep.subr.mxu0 0.0
    %118 = vmatpush1.msra.mxu0 0.0
    %119 = vmatprep.subr.mxu0 0.0
    %120 = vmatpush1.msra.mxu0 0.0
    %121 = vmatprep.subr.mxu0 0.0
    %122 = vmatpush1.msra.mxu0 0.0
    %123 = vmatprep.subr.mxu0 0.0
    %124 = vmatpush1.msra.mxu0 0.0
    %125 = vmatprep.mubr.f32.mxu0 0.0
    %v126 = vand.u32 %v55, 4294901760
    %v127 = vsub.f32 %v55, %v126
    %v128 = vand.u32 %v127, 4294901760
    %v129 = vsub.f32 %v127, %v128
    %v130 = vand.u32 %v129, 4294901760
    %131 = vmatmul.mubr.f32.gmra.mrb[0].mxu0 %v130
    %v132 = vpop.f32.mrb[0].mxu0
    %v133 = vadd.f32 %v51, %v132
    %v134 = vpop.f32.mrb[0].mxu0
    %135 = vdwg.mxu0
    %136 = vmatprep.subr.mxu0 0.0
    %v137 = vand.u32 %v42, 4294901760
    %v138 = vsub.f32 %v42, %v137
    %v139 = vand.u32 %v138, 4294901760
    %v140 = vsub.f32 %v138, %v139
    %v141 = vand.u32 %v140, 4294901760
    %142 = vmatpush1.msra.mxu0 %v141
    %143 = vmatprep.subr.mxu0 0.0
    %v144 = vand.u32 %v43, 4294901760
    %v145 = vsub.f32 %v43, %v144
    %v146 = vand.u32 %v145, 4294901760
    %v147 = vsub.f32 %v145, %v146
    %v148 = vand.u32 %v147, 4294901760
    %149 = vmatpush1.msra.mxu0 %v148
    %150 = vmatprep.subr.mxu0 0.0
    %v151 = vand.u32 %v44, 4294901760
    %v152 = vsub.f32 %v44, %v151
    %v153 = vand.u32 %v152, 4294901760
    %v154 = vsub.f32 %v152, %v153
    %v155 = vand.u32 %v154, 4294901760
    %156 = vmatpush1.msra.mxu0 %v155
    %157 = vmatprep.subr.mxu0 0.0
    %v158 = vand.u32 %v45, 4294901760
    %v159 = vsub.f32 %v45, %v158
    %v160 = vand.u32 %v159, 4294901760
    %v161 = vsub.f32 %v159, %v160
    %v162 = vand.u32 %v161, 4294901760
    %163 = vmatpush1.msra.mxu0 %v162
    %164 = vmatprep.subr.mxu0 0.0
    %165 = vmatpush1.msra.mxu0 0.0
    %166 = vmatprep.subr.mxu0 0.0
    %167 = vmatpush1.msra.mxu0 0.0
    %168 = vmatprep.subr.mxu0 0.0
    %169 = vmatpush1.msra.mxu0 0.0
    %170 = vmatprep.subr.mxu0 0.0
    %171 = vmatpush1.msra.mxu0 0.0
    %172 = vmatprep.subr.mxu0 0.0
    %173 = vmatpush1.msra.mxu0 0.0
    %174 = vmatprep.subr.mxu0 0.0
    %175 = vmatpush1.msra.mxu0 0.0
    %176 = vmatprep.subr.mxu0 0.0
    %177 = vmatpush1.msra.mxu0 0.0
    %178 = vmatprep.subr.mxu0 0.0
    %179 = vmatpush1.msra.mxu0 0.0
    %180 = vmatprep.subr.mxu0 0.0
    %181 = vmatpush1.msra.mxu0 0.0
    %182 = vmatprep.subr.mxu0 0.0
    %183 = vmatpush1.msra.mxu0 0.0
    %184 = vmatprep.subr.mxu0 0.0
    %185 = vmatpush1.msra.mxu0 0.0
    %186 = vmatprep.subr.mxu0 0.0
    %187 = vmatpush1.msra.mxu0 0.0
    %188 = vmatprep.subr.mxu0 0.0
    %189 = vmatpush1.msra.mxu0 0.0
    %190 = vmatprep.subr.mxu0 0.0
    %191 = vmatpush1.msra.mxu0 0.0
    %192 = vmatprep.subr.mxu0 0.0
    %193 = vmatpush1.msra.mxu0 0.0
    %194 = vmatprep.subr.mxu0 0.0
    %195 = vmatpush1.msra.mxu0 0.0
    %196 = vmatprep.subr.mxu0 0.0
    %197 = vmatpush1.msra.mxu0 0.0
    %198 = vmatprep.subr.mxu0 0.0
    %199 = vmatpush1.msra.mxu0 0.0
    %200 = vmatprep.subr.mxu0 0.0
    %201 = vmatpush1.msra.mxu0 0.0
    %202 = vmatprep.subr.mxu0 0.0
    %203 = vmatpush1.msra.mxu0 0.0
    %204 = vmatprep.subr.mxu0 0.0
    %205 = vmatpush1.msra.mxu0 0.0
    %206 = vmatprep.subr.mxu0 0.0
    %207 = vmatpush1.msra.mxu0 0.0
    %208 = vmatprep.subr.mxu0 0.0
    %209 = vmatpush1.msra.mxu0 0.0
    %210 = vmatprep.subr.mxu0 0.0
    %211 = vmatpush1.msra.mxu0 0.0
    %212 = vmatprep.subr.mxu0 0.0
    %213 = vmatpush1.msra.mxu0 0.0
    %214 = vmatprep.subr.mxu0 0.0
    %215 = vmatpush1.msra.mxu0 0.0
    %216 = vmatprep.subr.mxu0 0.0
    %217 = vmatpush1.msra.mxu0 0.0
    %218 = vmatprep.subr.mxu0 0.0
    %219 = vmatpush1.msra.mxu0 0.0
    %220 = vmatprep.mubr.f32.mxu0 0.0
    %v221 = vand.u32 %v55, 4294901760
    %222 = vmatmul.mubr.f32.gmra.mrb[0].mxu0 %v221
    %v223 = vpop.f32.mrb[0].mxu0
    %v224 = vadd.f32 %v133, %v223
    %v225 = vpop.f32.mrb[0].mxu0
    %226 = vdwg.mxu0
    %227 = vmatprep.subr.mxu0 0.0
    %v228 = vand.u32 %v42, 4294901760
    %v229 = vsub.f32 %v42, %v228
    %230 = vmatpush1.msra.mxu0 %v229
    %231 = vmatprep.subr.mxu0 0.0
    %v232 = vand.u32 %v43, 4294901760
    %v233 = vsub.f32 %v43, %v232
    %234 = vmatpush1.msra.mxu0 %v233
    %235 = vmatprep.subr.mxu0 0.0
    %v236 = vand.u32 %v44, 4294901760
    %v237 = vsub.f32 %v44, %v236
    %238 = vmatpush1.msra.mxu0 %v237
    %239 = vmatprep.subr.mxu0 0.0
    %v240 = vand.u32 %v45, 4294901760
    %v241 = vsub.f32 %v45, %v240
    %242 = vmatpush1.msra.mxu0 %v241
    %243 = vmatprep.subr.mxu0 0.0
    %244 = vmatpush1.msra.mxu0 0.0
    %245 = vmatprep.subr.mxu0 0.0
    %246 = vmatpush1.msra.mxu0 0.0
    %247 = vmatprep.subr.mxu0 0.0
    %248 = vmatpush1.msra.mxu0 0.0
    %249 = vmatprep.subr.mxu0 0.0
    %250 = vmatpush1.msra.mxu0 0.0
    %251 = vmatprep.subr.mxu0 0.0
    %252 = vmatpush1.msra.mxu0 0.0
    %253 = vmatprep.subr.mxu0 0.0
    %254 = vmatpush1.msra.mxu0 0.0
    %255 = vmatprep.subr.mxu0 0.0
    %256 = vmatpush1.msra.mxu0 0.0
    %257 = vmatprep.subr.mxu0 0.0
    %258 = vmatpush1.msra.mxu0 0.0
    %259 = vmatprep.subr.mxu0 0.0
    %260 = vmatpush1.msra.mxu0 0.0
    %261 = vmatprep.subr.mxu0 0.0
    %262 = vmatpush1.msra.mxu0 0.0
    %263 = vmatprep.subr.mxu0 0.0
    %264 = vmatpush1.msra.mxu0 0.0
    %265 = vmatprep.subr.mxu0 0.0
    %266 = vmatpush1.msra.mxu0 0.0
    %267 = vmatprep.subr.mxu0 0.0
    %268 = vmatpush1.msra.mxu0 0.0
    %269 = vmatprep.subr.mxu0 0.0
    %270 = vmatpush1.msra.mxu0 0.0
    %271 = vmatprep.subr.mxu0 0.0
    %272 = vmatpush1.msra.mxu0 0.0
    %273 = vmatprep.subr.mxu0 0.0
    %274 = vmatpush1.msra.mxu0 0.0
    %275 = vmatprep.subr.mxu0 0.0
    %276 = vmatpush1.msra.mxu0 0.0
    %277 = vmatprep.subr.mxu0 0.0
    %278 = vmatpush1.msra.mxu0 0.0
    %279 = vmatprep.subr.mxu0 0.0
    %280 = vmatpush1.msra.mxu0 0.0
    %281 = vmatprep.subr.mxu0 0.0
    %282 = vmatpush1.msra.mxu0 0.0
    %283 = vmatprep.subr.mxu0 0.0
    %284 = vmatpush1.msra.mxu0 0.0
    %285 = vmatprep.subr.mxu0 0.0
    %286 = vmatpush1.msra.mxu0 0.0
    %287 = vmatprep.subr.mxu0 0.0
    %288 = vmatpush1.msra.mxu0 0.0
    %289 = vmatprep.subr.mxu0 0.0
    %290 = vmatpush1.msra.mxu0 0.0
    %291 = vmatprep.subr.mxu0 0.0
    %292 = vmatpush1.msra.mxu0 0.0
    %293 = vmatprep.subr.mxu0 0.0
    %294 = vmatpush1.msra.mxu0 0.0
    %295 = vmatprep.subr.mxu0 0.0
    %296 = vmatpush1.msra.mxu0 0.0
    %297 = vmatprep.subr.mxu0 0.0
    %298 = vmatpush1.msra.mxu0 0.0
    %299 = vmatprep.mubr.f32.mxu0 0.0
    %v300 = vand.u32 %v55, 4294901760
    %v301 = vsub.f32 %v55, %v300
    %302 = vmatmul.mubr.f32.gmra.mrb[0].mxu0 %v301
    %v303 = vpop.f32.mrb[0].mxu0
    %v304 = vadd.f32 %v224, %v303
    %v305 = vpop.f32.mrb[0].mxu0
    %306 = vdwg.mxu0
    %307 = vmatprep.subr.mxu0 0.0
    %v308 = vand.u32 %v42, 4294901760
    %309 = vmatpush1.msra.mxu0 %v308
    %310 = vmatprep.subr.mxu0 0.0
    %v311 = vand.u32 %v43, 4294901760
    %312 = vmatpush1.msra.mxu0 %v311
    %313 = vmatprep.subr.mxu0 0.0
    %v314 = vand.u32 %v44, 4294901760
    %315 = vmatpush1.msra.mxu0 %v314
    %316 = vmatprep.subr.mxu0 0.0
    %v317 = vand.u32 %v45, 4294901760
    %318 = vmatpush1.msra.mxu0 %v317
    %319 = vmatprep.subr.mxu0 0.0
    %320 = vmatpush1.msra.mxu0 0.0
    %321 = vmatprep.subr.mxu0 0.0
    %322 = vmatpush1.msra.mxu0 0.0
    %323 = vmatprep.subr.mxu0 0.0
    %324 = vmatpush1.msra.mxu0 0.0
    %325 = vmatprep.subr.mxu0 0.0
    %326 = vmatpush1.msra.mxu0 0.0
    %327 = vmatprep.subr.mxu0 0.0
    %328 = vmatpush1.msra.mxu0 0.0
    %329 = vmatprep.subr.mxu0 0.0
    %330 = vmatpush1.msra.mxu0 0.0
    %331 = vmatprep.subr.mxu0 0.0
    %332 = vmatpush1.msra.mxu0 0.0
    %333 = vmatprep.subr.mxu0 0.0
    %334 = vmatpush1.msra.mxu0 0.0
    %335 = vmatprep.subr.mxu0 0.0
    %336 = vmatpush1.msra.mxu0 0.0
    %337 = vmatprep.subr.mxu0 0.0
    %338 = vmatpush1.msra.mxu0 0.0
    %339 = vmatprep.subr.mxu0 0.0
    %340 = vmatpush1.msra.mxu0 0.0
    %341 = vmatprep.subr.mxu0 0.0
    %342 = vmatpush1.msra.mxu0 0.0
    %343 = vmatprep.subr.mxu0 0.0
    %344 = vmatpush1.msra.mxu0 0.0
    %345 = vmatprep.subr.mxu0 0.0
    %346 = vmatpush1.msra.mxu0 0.0
    %347 = vmatprep.subr.mxu0 0.0
    %348 = vmatpush1.msra.mxu0 0.0
    %349 = vmatprep.subr.mxu0 0.0
    %350 = vmatpush1.msra.mxu0 0.0
    %351 = vmatprep.subr.mxu0 0.0
    %352 = vmatpush1.msra.mxu0 0.0
    %353 = vmatprep.subr.mxu0 0.0
    %354 = vmatpush1.msra.mxu0 0.0
    %355 = vmatprep.subr.mxu0 0.0
    %356 = vmatpush1.msra.mxu0 0.0
    %357 = vmatprep.subr.mxu0 0.0
    %358 = vmatpush1.msra.mxu0 0.0
    %359 = vmatprep.subr.mxu0 0.0
    %360 = vmatpush1.msra.mxu0 0.0
    %361 = vmatprep.subr.mxu0 0.0
    %362 = vmatpush1.msra.mxu0 0.0
    %363 = vmatprep.subr.mxu0 0.0
    %364 = vmatpush1.msra.mxu0 0.0
    %365 = vmatprep.subr.mxu0 0.0
    %366 = vmatpush1.msra.mxu0 0.0
    %367 = vmatprep.subr.mxu0 0.0
    %368 = vmatpush1.msra.mxu0 0.0
    %369 = vmatprep.subr.mxu0 0.0
    %370 = vmatpush1.msra.mxu0 0.0
    %371 = vmatprep.subr.mxu0 0.0
    %372 = vmatpush1.msra.mxu0 0.0
    %373 = vmatprep.subr.mxu0 0.0
    %374 = vmatpush1.msra.mxu0 0.0
    %375 = vmatprep.mubr.f32.mxu0 0.0
    %v376 = vand.u32 %v55, 4294901760
    %v377 = vsub.f32 %v55, %v376
    %v378 = vand.u32 %v377, 4294901760
    %379 = vmatmul.mubr.f32.gmra.mrb[0].mxu0 %v378
    %v380 = vpop.f32.mrb[0].mxu0
    %v381 = vadd.f32 %v304, %v380
    %v382 = vpop.f32.mrb[0].mxu0
    %383 = vdwg.mxu0
    %384 = vmatprep.subr.mxu0 0.0
    %v385 = vand.u32 %v42, 4294901760
    %v386 = vsub.f32 %v42, %v385
    %v387 = vand.u32 %v386, 4294901760
    %388 = vmatpush1.msra.mxu0 %v387
    %389 = vmatprep.subr.mxu0 0.0
    %v390 = vand.u32 %v43, 4294901760
    %v391 = vsub.f32 %v43, %v390
    %v392 = vand.u32 %v391, 4294901760
    %393 = vmatpush1.msra.mxu0 %v392
    %394 = vmatprep.subr.mxu0 0.0
    %v395 = vand.u32 %v44, 4294901760
    %v396 = vsub.f32 %v44, %v395
    %v397 = vand.u32 %v396, 4294901760
    %398 = vmatpush1.msra.mxu0 %v397
    %399 = vmatprep.subr.mxu0 0.0
    %v400 = vand.u32 %v45, 4294901760
    %v401 = vsub.f32 %v45, %v400
    %v402 = vand.u32 %v401, 4294901760
    %403 = vmatpush1.msra.mxu0 %v402
    %404 = vmatprep.subr.mxu0 0.0
    %405 = vmatpush1.msra.mxu0 0.0
    %406 = vmatprep.subr.mxu0 0.0
    %407 = vmatpush1.msra.mxu0 0.0
    %408 = vmatprep.subr.mxu0 0.0
    %409 = vmatpush1.msra.mxu0 0.0
    %410 = vmatprep.subr.mxu0 0.0
    %411 = vmatpush1.msra.mxu0 0.0
    %412 = vmatprep.subr.mxu0 0.0
    %413 = vmatpush1.msra.mxu0 0.0
    %414 = vmatprep.subr.mxu0 0.0
    %415 = vmatpush1.msra.mxu0 0.0
    %416 = vmatprep.subr.mxu0 0.0
    %417 = vmatpush1.msra.mxu0 0.0
    %418 = vmatprep.subr.mxu0 0.0
    %419 = vmatpush1.msra.mxu0 0.0
    %420 = vmatprep.subr.mxu0 0.0
    %421 = vmatpush1.msra.mxu0 0.0
    %422 = vmatprep.subr.mxu0 0.0
    %423 = vmatpush1.msra.mxu0 0.0
    %424 = vmatprep.subr.mxu0 0.0
    %425 = vmatpush1.msra.mxu0 0.0
    %426 = vmatprep.subr.mxu0 0.0
    %427 = vmatpush1.msra.mxu0 0.0
    %428 = vmatprep.subr.mxu0 0.0
    %429 = vmatpush1.msra.mxu0 0.0
    %430 = vmatprep.subr.mxu0 0.0
    %431 = vmatpush1.msra.mxu0 0.0
    %432 = vmatprep.subr.mxu0 0.0
    %433 = vmatpush1.msra.mxu0 0.0
    %434 = vmatprep.subr.mxu0 0.0
    %435 = vmatpush1.msra.mxu0 0.0
    %436 = vmatprep.subr.mxu0 0.0
    %437 = vmatpush1.msra.mxu0 0.0
    %438 = vmatprep.subr.mxu0 0.0
    %439 = vmatpush1.msra.mxu0 0.0
    %440 = vmatprep.subr.mxu0 0.0
    %441 = vmatpush1.msra.mxu0 0.0
    %442 = vmatprep.subr.mxu0 0.0
    %443 = vmatpush1.msra.mxu0 0.0
    %444 = vmatprep.subr.mxu0 0.0
    %445 = vmatpush1.msra.mxu0 0.0
    %446 = vmatprep.subr.mxu0 0.0
    %447 = vmatpush1.msra.mxu0 0.0
    %448 = vmatprep.subr.mxu0 0.0
    %449 = vmatpush1.msra.mxu0 0.0
    %450 = vmatprep.subr.mxu0 0.0
    %451 = vmatpush1.msra.mxu0 0.0
    %452 = vmatprep.subr.mxu0 0.0
    %453 = vmatpush1.msra.mxu0 0.0
    %454 = vmatprep.subr.mxu0 0.0
    %455 = vmatpush1.msra.mxu0 0.0
    %456 = vmatprep.subr.mxu0 0.0
    %457 = vmatpush1.msra.mxu0 0.0
    %458 = vmatprep.subr.mxu0 0.0
    %459 = vmatpush1.msra.mxu0 0.0
    %460 = vmatprep.mubr.f32.mxu0 0.0
    %v461 = vand.u32 %v55, 4294901760
    %462 = vmatmul.mubr.f32.gmra.mrb[0].mxu0 %v461
    %v463 = vpop.f32.mrb[0].mxu0
    %v464 = vadd.f32 %v381, %v463
    %v465 = vpop.f32.mrb[0].mxu0
    %466 = vdwg.mxu0
    %467 = vmatprep.subr.mxu0 0.0
    %v468 = vand.u32 %v42, 4294901760
    %469 = vmatpush1.msra.mxu0 %v468
    %470 = vmatprep.subr.mxu0 0.0
    %v471 = vand.u32 %v43, 4294901760
    %472 = vmatpush1.msra.mxu0 %v471
    %473 = vmatprep.subr.mxu0 0.0
    %v474 = vand.u32 %v44, 4294901760
    %475 = vmatpush1.msra.mxu0 %v474
    %476 = vmatprep.subr.mxu0 0.0
    %v477 = vand.u32 %v45, 4294901760
    %478 = vmatpush1.msra.mxu0 %v477
    %479 = vmatprep.subr.mxu0 0.0
    %480 = vmatpush1.msra.mxu0 0.0
    %481 = vmatprep.subr.mxu0 0.0
    %482 = vmatpush1.msra.mxu0 0.0
    %483 = vmatprep.subr.mxu0 0.0
    %484 = vmatpush1.msra.mxu0 0.0
    %485 = vmatprep.subr.mxu0 0.0
    %486 = vmatpush1.msra.mxu0 0.0
    %487 = vmatprep.subr.mxu0 0.0
    %488 = vmatpush1.msra.mxu0 0.0
    %489 = vmatprep.subr.mxu0 0.0
    %490 = vmatpush1.msra.mxu0 0.0
    %491 = vmatprep.subr.mxu0 0.0
    %492 = vmatpush1.msra.mxu0 0.0
    %493 = vmatprep.subr.mxu0 0.0
    %494 = vmatpush1.msra.mxu0 0.0
    %495 = vmatprep.subr.mxu0 0.0
    %496 = vmatpush1.msra.mxu0 0.0
    %497 = vmatprep.subr.mxu0 0.0
    %498 = vmatpush1.msra.mxu0 0.0
    %499 = vmatprep.subr.mxu0 0.0
    %500 = vmatpush1.msra.mxu0 0.0
    %501 = vmatprep.subr.mxu0 0.0
    %502 = vmatpush1.msra.mxu0 0.0
    %503 = vmatprep.subr.mxu0 0.0
    %504 = vmatpush1.msra.mxu0 0.0
    %505 = vmatprep.subr.mxu0 0.0
    %506 = vmatpush1.msra.mxu0 0.0
    %507 = vmatprep.subr.mxu0 0.0
    %508 = vmatpush1.msra.mxu0 0.0
    %509 = vmatprep.subr.mxu0 0.0
    %510 = vmatpush1.msra.mxu0 0.0
    %511 = vmatprep.subr.mxu0 0.0
    %512 = vmatpush1.msra.mxu0 0.0
    %513 = vmatprep.subr.mxu0 0.0
    %514 = vmatpush1.msra.mxu0 0.0
    %515 = vmatprep.subr.mxu0 0.0
    %516 = vmatpush1.msra.mxu0 0.0
    %517 = vmatprep.subr.mxu0 0.0
    %518 = vmatpush1.msra.mxu0 0.0
    %519 = vmatprep.subr.mxu0 0.0
    %520 = vmatpush1.msra.mxu0 0.0
    %521 = vmatprep.subr.mxu0 0.0
    %522 = vmatpush1.msra.mxu0 0.0
    %523 = vmatprep.subr.mxu0 0.0
    %524 = vmatpush1.msra.mxu0 0.0
    %525 = vmatprep.subr.mxu0 0.0
    %526 = vmatpush1.msra.mxu0 0.0
    %527 = vmatprep.subr.mxu0 0.0
    %528 = vmatpush1.msra.mxu0 0.0
    %529 = vmatprep.subr.mxu0 0.0
    %530 = vmatpush1.msra.mxu0 0.0
    %531 = vmatprep.subr.mxu0 0.0
    %532 = vmatpush1.msra.mxu0 0.0
    %533 = vmatprep.subr.mxu0 0.0
    %534 = vmatpush1.msra.mxu0 0.0
    %535 = vmatprep.mubr.f32.mxu0 0.0
    %v536 = vand.u32 %v55, 4294901760
    %537 = vmatmul.mubr.f32.gmra.mrb[0].mxu0 %v536
    %v538 = vpop.f32.mrb[0].mxu0
    %v539 = vadd.f32 %v464, %v538
    %v540 = vpop.f32.mrb[0].mxu0
    %541 = vdwg.mxu0
    %v542 = vmul.f32 %v539, %v539
    %v543 = vsel %vm53, %v542, 0.0
    %544 = vadd.xlane.f32.xlu0 %v543
    %v545 = vpop.xlane.xlu0 %544
    %v546 = vmax.f32 %v545, 1e-24
    %v547 = vrsqrt.pop %v546
    %v548 = vmul.f32 %v539, %v547
    %549 = vst.msk [vmem:[#allocation7] sm:$0xff] %vm53, %v548
    // Predicated region
    $region22: #{tpu_custom_call.1} parent=1 // pred_check
      _
    $region23: #{tpu_custom_call.1} parent=1 // pred_check_branch
      %551 = sbr.rel (0) target = $region25
    $region24: #{tpu_custom_call.1} parent=1 // pred_region
      %s553 = ssub.s32 128, 128
      %554 = vsyncadd [#allocation4], %s553
      %s556 = sshll.u32 [#allocation7], 4
      %s557 = int_to_ptr.vmem [resolvable:$true] %s556
      %559 = dma.vmem_to_hbm [thread:$0]  %s557, 128, %s3, [#allocation4]
    $region25: #{tpu_custom_call.1} parent=1 // pred_fallthru
      _
    // Predicated region
    $region26: #{tpu_custom_call.1} parent=1 // pred_check
      _
    $region27: #{tpu_custom_call.1} parent=1 // pred_check_branch
      %561 = sbr.rel (0) target = $region29
    $region28: #{tpu_custom_call.1} parent=1 // pred_region
      %562 = dma.done [#allocation4], 128
    $region29: #{tpu_custom_call.1} parent=1 // pred_fallthru
      _
    %563 = vsyncpa [#allocation3], 1
    %564 = vsyncpa [#allocation6], 1
    %565 = vsyncpa [#allocation4], 1

</llo_original>
